<compile_context>
chip_gen: v7x
topology: tpu7x:2x2x1
jax: 0.10.0
libtpu: 0.0.40
codegen_flags: <defaults>
</compile_context>

<pallas_src>
import jax
import jax.numpy as jnp
from jax import lax
from jax.experimental import pallas as pl
from jax.experimental.pallas import tpu as pltpu


_PAIRWISE_MAX_D = 128      # pairwise O(D^2) kernel up to here, bisection above
_N_BISECT = 30             # interval width 2^-30 (< f32 eps of the bracket)


# ---------------------------------------------------------------------------
# Kernels
# ---------------------------------------------------------------------------
def _sparsemax_pairwise_kernel(x_ref, o_ref):
    """(TM, D) tile, D small: fused pairwise support test, exact."""
    x = x_ref[...].astype(jnp.float32)                       # (TM, D)
    row_max = jnp.max(x, axis=-1, keepdims=True)              # (TM, 1)
    z = x - row_max                                            # row max -> 0

    # t_i = sum_j min(z_i - z_j, 0);  support_i <=> 1 + t_i > 0
    t = jnp.sum(jnp.minimum(z[:, :, None] - z[:, None, :], 0.0), axis=-1)
    supp = (1.0 + t) > 0.0                                               # (TM, D)
    k = jnp.sum(supp.astype(jnp.float32), axis=-1, keepdims=True)        # (TM, 1)
    sum_supp = jnp.sum(jnp.where(supp, z, 0.0), axis=-1, keepdims=True)  # (TM, 1)
    tau = (sum_supp - 1.0) / k          # k >= 1 always (row max is in support)

    o_ref[...] = jnp.maximum(z - tau, 0.0).astype(o_ref.dtype)


def _sparsemax_bisect_kernel(x_ref, o_ref):
    """(TM, D) tile, D large: bisection on tau + exact support refinement."""
    x = x_ref[...].astype(jnp.float32)                        # (TM, D)
    row_max = jnp.max(x, axis=-1, keepdims=True)               # (TM, 1)
    z = x - row_max                                             # row max -> 0

    tm = z.shape[0]
    # f(tau) = sum_i max(z_i - tau, 0) is decreasing; f(-1) >= 1 >= f(0) = 0.
    lo0 = jnp.full((tm, 1), -1.0, dtype=jnp.float32)
    hi0 = jnp.zeros((tm, 1), dtype=jnp.float32)

    def body(_, carry):
        lo, hi = carry
        mid = 0.5 * (lo + hi)
        f = jnp.sum(jnp.maximum(z - mid, 0.0), axis=-1, keepdims=True)
        gt = f > 1.0                       # f(mid) > 1  =>  tau_true > mid
        return jnp.where(gt, mid, lo), jnp.where(gt, hi, mid)

    lo, hi = lax.fori_loop(0, _N_BISECT, body, (lo0, hi0))
    tau_c = 0.5 * (lo + hi)                                    # < 0 = max(z)

    # Exact refinement: recover the support from the bracketed threshold and
    # recompute tau in closed form so ties / boundary elements match the
    # sorted reference formulation.
    supp = z > tau_c
    k = jnp.sum(supp.astype(jnp.float32), axis=-1, keepdims=True)        # >= 1
    sum_supp = jnp.sum(jnp.where(supp, z, 0.0), axis=-1, keepdims=True)
    tau = (sum_supp - 1.0) / k

    o_ref[...] = jnp.maximum(z - tau, 0.0).astype(o_ref.dtype)


# ---------------------------------------------------------------------------
# Row-tile sizing
# ---------------------------------------------------------------------------
def _clamp_block_rows(tm, n_rows):
    if n_rows <= 8:
        return n_rows                      # single block equal to full rows
    return max(8, min(tm, (n_rows // 8) * 8))


def _pick_block_rows_pairwise(n_rows, d, itemsize):
    # The (TM, d, d) f32 min-slab dominates VMEM; keep it ~<= 4 MiB.
    del itemsize
    tm = (4 * 1024 * 1024) // max(4 * d * d, 1)
    tm = max(8, min(512, (tm // 8) * 8))
    return _clamp_block_rows(tm, n_rows)


def _pick_block_rows_bisect(n_rows, d, itemsize):
    # Double-buffered in/out blocks (2*2*d*itemsize per row) plus ~3 live f32
    # copies of the (TM, d) tile inside the kernel; keep total ~<= 24 MiB.
    per_row = 4 * d * itemsize + 12 * d
    tm = (24 * 1024 * 1024) // max(per_row, 1)
    tm = max(8, min(256, (tm // 8) * 8))
    return _clamp_block_rows(tm, n_rows)


# ---------------------------------------------------------------------------
# pallas_call wrapper
# ---------------------------------------------------------------------------
def _sparsemax_2d(x2d, block_rows=None):
    n_rows, d = x2d.shape
    pairwise = d <= _PAIRWISE_MAX_D
    kernel = _sparsemax_pairwise_kernel if pairwise else _sparsemax_bisect_kernel
    if block_rows is None:
        pick = _pick_block_rows_pairwise if pairwise else _pick_block_rows_bisect
        block_rows = pick(n_rows, d, x2d.dtype.itemsize)

    # Ragged last tile is fine: rows are independent and OOB rows aren't
    # written back.
    grid = (pl.cdiv(n_rows, block_rows),)
    return pl.pallas_call(
        kernel,
        out_shape=jax.ShapeDtypeStruct((n_rows, d), x2d.dtype),
        grid_spec=pltpu.PrefetchScalarGridSpec(
            num_scalar_prefetch=0,
            grid=grid,
            in_specs=[pl.BlockSpec((block_rows, d), lambda i: (i, 0))],
            out_specs=pl.BlockSpec((block_rows, d), lambda i: (i, 0)),
        ),
        compiler_params=pltpu.CompilerParams(
            dimension_semantics=("parallel",),
            vmem_limit_bytes=32 * 1024 * 1024,   # same budget on v5e/v6e/v7x
        ),
    )(x2d)


def sparsemax(x, dim=-1, block_rows=None):
    """Sparsemax along `dim`; same shape/dtype as input (forward only)."""
    # TODO(synk): backward pass of SparsemaxFunction is not implemented here
    # (forward-only kernel, as requested).
    x = jnp.asarray(x)
    dim = dim % x.ndim
    xm = jnp.moveaxis(x, dim, -1)
    lead_shape = xm.shape[:-1]
    d = xm.shape[-1]
    x2d = xm.reshape((-1, d))
    out2d = _sparsemax_2d(x2d, block_rows)
    out = out2d.reshape(lead_shape + (d,))
    return jnp.moveaxis(out, -1, dim)


class Sparsemax:
    """Mirror of the PyTorch nn.Module (forward only, no parameters)."""

    def __init__(self, dim=-1):
        self.dim = dim

    def __call__(self, x):
        return sparsemax(x, self.dim)


# ---------------------------------------------------------------------------
# Pure-JAX reference (mirrors the PyTorch sort/cumsum implementation)
# ---------------------------------------------------------------------------
def _sparsemax_ref(x, dim=-1):
    z = x - jnp.max(x, axis=dim, keepdims=True)
    z_srt = -jnp.sort(-z, axis=dim)                     # descending
    cs = jnp.cumsum(z_srt, axis=dim) - 1.0
    d = x.shape[dim]
    shape = [1] * x.ndim
    shape[dim] = d
    rhos = jnp.arange(1, d + 1, dtype=x.dtype).reshape(shape)
    support = rhos * z_srt > cs
    k = jnp.sum(support, axis=dim, keepdims=True)
    tau = jnp.take_along_axis(cs, k - 1, axis=dim) / k.astype(x.dtype)
    return jnp.clip(z - tau, 0.0, None)


if __name__ == "__main__":
    key = jax.random.PRNGKey(0)
    k1, k2, k3, k4 = jax.random.split(key, 4)

    # 1) Primary TabNet-like small shape (pairwise kernel).
    x = jax.random.normal(key, (8, 32), dtype=jnp.float32) * 2.0
    mod = Sparsemax(dim=-1)
    out = jax.block_until_ready(mod(x))
    assert out.shape == x.shape and out.dtype == x.dtype
    assert jnp.allclose(out, _sparsemax_ref(x, dim=-1), atol=1e-5, rtol=1e-5)
    assert jnp.allclose(jnp.sum(out, axis=-1), 1.0, atol=1e-5)

    # 2) Ragged row count (exercises the cdiv ragged last tile).
    x2 = jax.random.normal(k1, (13, 40), dtype=jnp.float32) * 3.0
    out2 = jax.block_until_ready(sparsemax(x2, dim=-1))
    assert jnp.allclose(out2, _sparsemax_ref(x2, dim=-1), atol=1e-5, rtol=1e-5)
    assert jnp.allclose(jnp.sum(out2, axis=-1), 1.0, atol=1e-5)

    # 3) Larger feature dim (bisection kernel).
    x3 = jax.random.normal(k2, (16, 640), dtype=jnp.float32)
    out3 = jax.block_until_ready(sparsemax(x3, dim=-1))
    assert jnp.allclose(out3, _sparsemax_ref(x3, dim=-1), atol=1e-5, rtol=1e-5)
    assert jnp.allclose(jnp.sum(out3, axis=-1), 1.0, atol=1e-5)

    # 4) Bisection kernel with D not a multiple of 128 and < 8 rows.
    x4 = jax.random.normal(k3, (4, 200), dtype=jnp.float32) * 2.0
    out4 = jax.block_until_ready(sparsemax(x4, dim=-1))
    assert jnp.allclose(out4, _sparsemax_ref(x4, dim=-1), atol=1e-5, rtol=1e-5)
    assert jnp.allclose(jnp.sum(out4, axis=-1), 1.0, atol=1e-5)

    # 5) Non-last dim (exercises the moveaxis/reshape glue).
    x5 = jax.random.normal(k4, (2, 32, 6), dtype=jnp.float32)
    out5 = jax.block_until_ready(sparsemax(x5, dim=1))
    assert jnp.allclose(out5, _sparsemax_ref(x5, dim=1), atol=1e-5, rtol=1e-5)
    assert jnp.allclose(jnp.sum(out5, axis=1), 1.0, atol=1e-5)

    print("KERNEL_OK")
</pallas_src>

<mosaic_0001>
module attributes {stable_mosaic.version = 11 : i64} {
  func.func @_sparsemax_pairwise_kernel(%arg0: i32, %arg1: memref<8x32xf32, #tpu.memory_space<vmem>>, %arg2: memref<8x32xf32, #tpu.memory_space<vmem>>) attributes {dimension_semantics = [#tpu.dimension_semantics<parallel>], iteration_bounds = array<i64: 1>, scalar_prefetch = 0 : i64, scratch_operands = 0 : i64, tpu.core_type = #tpu.core_type<tc>, window_params = [{transform_indices = @transform_0, window_bounds = array<i64: 8, 32>}, {transform_indices = @transform_1, window_bounds = array<i64: 8, 32>}]} {
    %c0 = arith.constant 0 : index
    %c0_0 = arith.constant 0 : index
    %0 = vector.load %arg1[%c0, %c0_0] : memref<8x32xf32, #tpu.memory_space<vmem>>, vector<8x32xf32>
    %cst = arith.constant dense<0xFF800000> : vector<8xf32>
    %1 = vector.multi_reduction <maximumf>, %0, %cst [1] : vector<8x32xf32> to vector<8xf32>
    %2 = vector.shape_cast %1 : vector<8xf32> to vector<8x1xf32>
    %3 = vector.broadcast %2 : vector<8x1xf32> to vector<8x32xf32>
    %4 = arith.subf %0, %3 : vector<8x32xf32>
    %5 = vector.shape_cast %4 : vector<8x32xf32> to vector<8x32x1xf32>
    %6 = vector.shape_cast %4 : vector<8x32xf32> to vector<8x1x32xf32>
    %7 = vector.broadcast %5 : vector<8x32x1xf32> to vector<8x32x32xf32>
    %8 = vector.broadcast %6 : vector<8x1x32xf32> to vector<8x32x32xf32>
    %9 = arith.subf %7, %8 : vector<8x32x32xf32>
    %cst_1 = arith.constant 0.000000e+00 : f32
    %10 = vector.broadcast %cst_1 : f32 to vector<8x32x32xf32>
    %11 = arith.minimumf %9, %10 : vector<8x32x32xf32>
    %cst_2 = arith.constant dense<0.000000e+00> : vector<8x32xf32>
    %12 = vector.multi_reduction <add>, %11, %cst_2 [2] : vector<8x32x32xf32> to vector<8x32xf32>
    %cst_3 = arith.constant 1.000000e+00 : f32
    %13 = vector.broadcast %cst_3 : f32 to vector<8x32xf32>
    %14 = arith.addf %13, %12 : vector<8x32xf32>
    %cst_4 = arith.constant 0.000000e+00 : f32
    %15 = vector.broadcast %cst_4 : f32 to vector<8x32xf32>
    %16 = arith.cmpf ogt, %14, %15 : vector<8x32xf32>
    %17 = arith.extui %16 : vector<8x32xi1> to vector<8x32xi32>
    %18 = arith.sitofp %17 : vector<8x32xi32> to vector<8x32xf32>
    %cst_5 = arith.constant dense<0.000000e+00> : vector<8xf32>
    %19 = vector.multi_reduction <add>, %18, %cst_5 [1] : vector<8x32xf32> to vector<8xf32>
    %20 = vector.shape_cast %19 : vector<8xf32> to vector<8x1xf32>
    %cst_6 = arith.constant 0.000000e+00 : f32
    %21 = vector.broadcast %cst_6 : f32 to vector<8x32xf32>
    %22 = arith.select %16, %4, %21 : vector<8x32xi1>, vector<8x32xf32>
    %cst_7 = arith.constant dense<0.000000e+00> : vector<8xf32>
    %23 = vector.multi_reduction <add>, %22, %cst_7 [1] : vector<8x32xf32> to vector<8xf32>
    %24 = vector.shape_cast %23 : vector<8xf32> to vector<8x1xf32>
    %cst_8 = arith.constant 1.000000e+00 : f32
    %25 = vector.broadcast %cst_8 : f32 to vector<8x1xf32>
    %26 = arith.subf %24, %25 : vector<8x1xf32>
    %27 = arith.divf %26, %20 : vector<8x1xf32>
    %28 = vector.broadcast %27 : vector<8x1xf32> to vector<8x32xf32>
    %29 = arith.subf %4, %28 : vector<8x32xf32>
    %cst_9 = arith.constant 0.000000e+00 : f32
    %30 = vector.broadcast %cst_9 : f32 to vector<8x32xf32>
    %31 = arith.maximumf %29, %30 : vector<8x32xf32>
    %c0_10 = arith.constant 0 : index
    %c0_11 = arith.constant 0 : index
    %32 = vector.load %arg2[%c0_10, %c0_11] : memref<8x32xf32, #tpu.memory_space<vmem>>, vector<8x32xf32>
    tpu.vector_store %arg2[%c0_10, %c0_11], %31 {strides = array<i32>} : memref<8x32xf32, #tpu.memory_space<vmem>>, vector<8x32xf32>,
    return
  }
  func.func @transform_0(%arg0: i32) -> (i32, i32) {
    %c0_i32 = arith.constant 0 : i32
    %c0_i32_0 = arith.constant 0 : i32
    return %arg0, %c0_i32 : i32, i32
  }
  func.func @transform_1(%arg0: i32) -> (i32, i32) {
    %c0_i32 = arith.constant 0 : i32
    %c0_i32_0 = arith.constant 0 : i32
    return %arg0, %c0_i32 : i32, i32
  }
}

</mosaic_0001>

<llo_original>
// kernel: tpu_custom_call.1
$region0: #{tpu_custom_call.1}
  #allocation0 [shape = 'u32[]', space=smem, size = 0x4, offset = 0x4, fixed_abs, tag = 'smem constant byte address 0x4 - core index']
  #allocation1 [shape = 'u32[144,128]{1,0:T(1,128)}', space=vmem, size = 0x12000, scoped, tag = 'internal scratch']
  %s0 = inlined_call_operand.hbm [shape: f32[8,32], index: 0, kind: input, shape index: {}]
  %s1 = inlined_call_operand.hbm [shape: f32[8,32], index: 1, kind: output, shape index: {}]
  %s2 = sld [smem:[#allocation0]]
  $region18: #{tpu_custom_call.1} parent=0
    _
  %s4 = ssub.s32 1, %s2
  %s5 = scalar_select 0, %s4, %s2
  $region1: #{tpu_custom_call.1} parent=0
    #allocation2 [shape = 'u8[4096]{0}', space=vmem, size = 0x1000, scoped, tag = 'input window, operand 0, single buffered']
    #allocation3 [shape = 's32[1]{0}', space=sflag, size = 0x4, scoped, tag = 'scoped memory for tpu_custom_call.1']
    #allocation4 [shape = 's32[1]{0}', space=sflag, size = 0x4, scoped, tag = 'scoped memory for tpu_custom_call.1']
    #allocation5 [shape = 'u8[4096]{0}', space=vmem, size = 0x1000, scoped, tag = 'output window, operand 0, single buffered']
    %6 = vsyncpa [#allocation3], 0
    %7 = vsyncpa [#allocation4], 0
    // Predicated region
    $region2: #{tpu_custom_call.1} parent=1 // pred_check
      _
    $region3: #{tpu_custom_call.1} parent=1 // pred_check_branch
      %9 = sbr.rel (0) target = $region5
    $region4: #{tpu_custom_call.1} parent=1 // pred_region
      %s11 = ssub.s32 128, 128
      %12 = vsyncadd [#allocation3], %s11
      %s14 = sshll.u32 [#allocation2], 4
      %s15 = int_to_ptr.vmem [resolvable:$true] %s14
      %17 = dma.hbm_to_vmem [thread:$0]  %s0, 128, %s15, [#allocation3]
    $region5: #{tpu_custom_call.1} parent=1 // pred_fallthru
      _
    // Predicated region
    $region6: #{tpu_custom_call.1} parent=1 // pred_check
      _
    $region7: #{tpu_custom_call.1} parent=1 // pred_check_branch
      %19 = sbr.rel (0) target = $region9
    $region8: #{tpu_custom_call.1} parent=1 // pred_region
      %20 = dma.done [#allocation3], 128
    $region9: #{tpu_custom_call.1} parent=1 // pred_fallthru
      _
    %v21 = vld [vmem:[#allocation2] sm:$0xff]
    %vm22 = vcmask 261120
    %v23 = vsel %vm22, %v21, -inf
    %24 = vmax.xlane.f32.xlu0 %v23
    %v25 = vpop.xlane.xlu0 %24
    %v26 = vsub.f32 %v21, %v25
    %v27 = vlaneseq
    %v28 = vshrl.u32 %v27, 7
    %v29 = vsub.s32 0, %v28
    %v30 = vrot.slane %v26, %v29
    %32 = vbcast.lane.b32.xlu0 %v30, 256
    %v33 = vpop.permute.xlu0 %32
    %s35 = sor.u32 256, 8
    %36 = vbcast.lane.b32.xlu0 %v30, %s35
    %v37 = vpop.permute.xlu0 %36
    %s39 = sor.u32 256, 16
    %40 = vbcast.lane.b32.xlu0 %v30, %s39
    %v41 = vpop.permute.xlu0 %40
    %s43 = sor.u32 256, 24
    %44 = vbcast.lane.b32.xlu0 %v30, %s43
    %v45 = vpop.permute.xlu0 %44
    %v46 = vlaneseq
    %v47 = vshrl.u32 %v46, 7
    %v48 = vsub.s32 1, %v47
    %v49 = vrot.slane %v26, %v48
    %51 = vbcast.lane.b32.xlu0 %v49, 256
    %v52 = vpop.permute.xlu0 %51
    %s54 = sor.u32 256, 8
    %55 = vbcast.lane.b32.xlu0 %v49, %s54
    %v56 = vpop.permute.xlu0 %55
    %s58 = sor.u32 256, 16
    %59 = vbcast.lane.b32.xlu0 %v49, %s58
    %v60 = vpop.permute.xlu0 %59
    %s62 = sor.u32 256, 24
    %63 = vbcast.lane.b32.xlu0 %v49, %s62
    %v64 = vpop.permute.xlu0 %63
    %v65 = vlaneseq
    %v66 = vshrl.u32 %v65, 7
    %v67 = vsub.s32 2, %v66
    %v68 = vrot.slane %v26, %v67
    %70 = vbcast.lane.b32.xlu0 %v68, 256
    %v71 = vpop.permute.xlu0 %70
    %s73 = sor.u32 256, 8
    %74 = vbcast.lane.b32.xlu0 %v68, %s73
    %v75 = vpop.permute.xlu0 %74
    %s77 = sor.u32 256, 16
    %78 = vbcast.lane.b32.xlu0 %v68, %s77
    %v79 = vpop.permute.xlu0 %78
    %s81 = sor.u32 256, 24
    %82 = vbcast.lane.b32.xlu0 %v68, %s81
    %v83 = vpop.permute.xlu0 %82
    %v84 = vlaneseq
    %v85 = vshrl.u32 %v84, 7
    %v86 = vsub.s32 3, %v85
    %v87 = vrot.slane %v26, %v86
    %89 = vbcast.lane.b32.xlu0 %v87, 256
    %v90 = vpop.permute.xlu0 %89
    %s92 = sor.u32 256, 8
    %93 = vbcast.lane.b32.xlu0 %v87, %s92
    %v94 = vpop.permute.xlu0 %93
    %s96 = sor.u32 256, 16
    %97 = vbcast.lane.b32.xlu0 %v87, %s96
    %v98 = vpop.permute.xlu0 %97
    %s100 = sor.u32 256, 24
    %101 = vbcast.lane.b32.xlu0 %v87, %s100
    %v102 = vpop.permute.xlu0 %101
    %v103 = vlaneseq
    %v104 = vshrl.u32 %v103, 7
    %v105 = vsub.s32 4, %v104
    %v106 = vrot.slane %v26, %v105
    %108 = vbcast.lane.b32.xlu0 %v106, 256
    %v109 = vpop.permute.xlu0 %108
    %s111 = sor.u32 256, 8
    %112 = vbcast.lane.b32.xlu0 %v106, %s111
    %v113 = vpop.permute.xlu0 %112
    %s115 = sor.u32 256, 16
    %116 = vbcast.lane.b32.xlu0 %v106, %s115
    %v117 = vpop.permute.xlu0 %116
    %s119 = sor.u32 256, 24
    %120 = vbcast.lane.b32.xlu0 %v106, %s119
    %v121 = vpop.permute.xlu0 %120
    %v122 = vlaneseq
    %v123 = vshrl.u32 %v122, 7
    %v124 = vsub.s32 5, %v123
    %v125 = vrot.slane %v26, %v124
    %127 = vbcast.lane.b32.xlu0 %v125, 256
    %v128 = vpop.permute.xlu0 %127
    %s130 = sor.u32 256, 8
    %131 = vbcast.lane.b32.xlu0 %v125, %s130
    %v132 = vpop.permute.xlu0 %131
    %s134 = sor.u32 256, 16
    %135 = vbcast.lane.b32.xlu0 %v125, %s134
    %v136 = vpop.permute.xlu0 %135
    %s138 = sor.u32 256, 24
    %139 = vbcast.lane.b32.xlu0 %v125, %s138
    %v140 = vpop.permute.xlu0 %139
    %v141 = vlaneseq
    %v142 = vshrl.u32 %v141, 7
    %v143 = vsub.s32 6, %v142
    %v144 = vrot.slane %v26, %v143
    %146 = vbcast.lane.b32.xlu0 %v144, 256
    %v147 = vpop.permute.xlu0 %146
    %s149 = sor.u32 256, 8
    %150 = vbcast.lane.b32.xlu0 %v144, %s149
    %v151 = vpop.permute.xlu0 %150
    %s153 = sor.u32 256, 16
    %154 = vbcast.lane.b32.xlu0 %v144, %s153
    %v155 = vpop.permute.xlu0 %154
    %s157 = sor.u32 256, 24
    %158 = vbcast.lane.b32.xlu0 %v144, %s157
    %v159 = vpop.permute.xlu0 %158
    %v160 = vlaneseq
    %v161 = vshrl.u32 %v160, 7
    %v162 = vsub.s32 7, %v161
    %v163 = vrot.slane %v26, %v162
    %165 = vbcast.lane.b32.xlu0 %v163, 256
    %v166 = vpop.permute.xlu0 %165
    %s168 = sor.u32 256, 8
    %169 = vbcast.lane.b32.xlu0 %v163, %s168
    %v170 = vpop.permute.xlu0 %169
    %s172 = sor.u32 256, 16
    %173 = vbcast.lane.b32.xlu0 %v163, %s172
    %v174 = vpop.permute.xlu0 %173
    %s176 = sor.u32 256, 24
    %177 = vbcast.lane.b32.xlu0 %v163, %s176
    %v178 = vpop.permute.xlu0 %177
    %v180 = vcombine.high %v26, %v26
    %v182 = vunpack.c.l.s4 1966171168
    %v183 = vunpack.c.0.s8 %v182
    %v184 = vlaneseq
    %v185 = vshrl.u32 %v184, 7
    %v186 = vsub.s32 %v183, %v185
    %v187 = vrot.slane %v26, %v186
    %v189 = vunpack.c.l.s4 1966171168
    %v190 = vunpack.c.0.s8 %v189
    %v191 = vlaneseq
    %v192 = vshrl.u32 %v191, 7
    %v193 = vsub.s32 %v190, %v192
    %v194 = vrot.slane %v180, %v193
    %v195 = vcombine.high %v187, %v187
    %v196 = vcombine.high %v194, %v194
    %v198 = vunpack.c.l.s4 1966171168
    %v199 = vunpack.c.0.s8 %v198
    %v200 = vlaneseq
    %v201 = vshrl.u32 %v200, 7
    %v202 = vsub.s32 %v199, %v201
    %v203 = vrot.slane %v187, %v202
    %v205 = vunpack.c.l.s4 1966171168
    %v206 = vunpack.c.0.s8 %v205
    %v207 = vlaneseq
    %v208 = vshrl.u32 %v207, 7
    %v209 = vsub.s32 %v206, %v208
    %v210 = vrot.slane %v194, %v209
    %v212 = vunpack.c.l.s4 1966171168
    %v213 = vunpack.c.0.s8 %v212
    %v214 = vlaneseq
    %v215 = vshrl.u32 %v214, 7
    %v216 = vsub.s32 %v213, %v215
    %v217 = vrot.slane %v195, %v216
    %v219 = vunpack.c.l.s4 1966171168
    %v220 = vunpack.c.0.s8 %v219
    %v221 = vlaneseq
    %v222 = vshrl.u32 %v221, 7
    %v223 = vsub.s32 %v220, %v222
    %v224 = vrot.slane %v196, %v223
    %v225 = vcombine.high %v203, %v203
    %v226 = vcombine.high %v210, %v210
    %v227 = vcombine.high %v217, %v217
    %v228 = vcombine.high %v224, %v224
    %v229 = vlaneseq
    %v230 = vshrl.u32 %v229, 7
    %v231 = vsub.s32 0, %v230
    %v232 = vrot.slane %v203, %v231
    %v233 = vlaneseq
    %v234 = vshrl.u32 %v233, 7
    %v235 = vsub.s32 0, %v234
    %v236 = vrot.slane %v217, %v235
    %v237 = vlaneseq
    %v238 = vshrl.u32 %v237, 7
    %v239 = vsub.s32 0, %v238
    %v240 = vrot.slane %v225, %v239
    %v241 = vlaneseq
    %v242 = vshrl.u32 %v241, 7
    %v243 = vsub.s32 0, %v242
    %v244 = vrot.slane %v227, %v243
    %v245 = vlaneseq
    %v246 = vshrl.u32 %v245, 7
    %v247 = vsub.s32 0, %v246
    %v248 = vrot.slane %v210, %v247
    %v249 = vlaneseq
    %v250 = vshrl.u32 %v249, 7
    %v251 = vsub.s32 0, %v250
    %v252 = vrot.slane %v224, %v251
    %v253 = vlaneseq
    %v254 = vshrl.u32 %v253, 7
    %v255 = vsub.s32 0, %v254
    %v256 = vrot.slane %v226, %v255
    %v257 = vlaneseq
    %v258 = vshrl.u32 %v257, 7
    %v259 = vsub.s32 0, %v258
    %v260 = vrot.slane %v228, %v259
    %v269 = vsub.f32 %v33, %v232
    %v270 = vsub.f32 %v37, %v232
    %v271 = vsub.f32 %v41, %v232
    %v272 = vsub.f32 %v45, %v232
    %v273 = vsub.f32 %v52, %v236
    %v274 = vsub.f32 %v56, %v236
    %v275 = vsub.f32 %v60, %v236
    %v276 = vsub.f32 %v64, %v236
    %v277 = vsub.f32 %v71, %v240
    %v278 = vsub.f32 %v75, %v240
    %v279 = vsub.f32 %v79, %v240
    %v280 = vsub.f32 %v83, %v240
    %v281 = vsub.f32 %v90, %v244
    %v282 = vsub.f32 %v94, %v244
    %v283 = vsub.f32 %v98, %v244
    %v284 = vsub.f32 %v102, %v244
    %v285 = vsub.f32 %v109, %v248
    %v286 = vsub.f32 %v113, %v248
    %v287 = vsub.f32 %v117, %v248
    %v288 = vsub.f32 %v121, %v248
    %v289 = vsub.f32 %v128, %v252
    %v290 = vsub.f32 %v132, %v252
    %v291 = vsub.f32 %v136, %v252
    %v292 = vsub.f32 %v140, %v252
    %v293 = vsub.f32 %v147, %v256
    %v294 = vsub.f32 %v151, %v256
    %v295 = vsub.f32 %v155, %v256
    %v296 = vsub.f32 %v159, %v256
    %v297 = vsub.f32 %v166, %v260
    %v298 = vsub.f32 %v170, %v260
    %v299 = vsub.f32 %v174, %v260
    %v300 = vsub.f32 %v178, %v260
    %v301 = vmin.f32 %v269, 0.0
    %v302 = vmin.f32 %v270, 0.0
    %v303 = vmin.f32 %v271, 0.0
    %v304 = vmin.f32 %v272, 0.0
    %v305 = vmin.f32 %v273, 0.0
    %v306 = vmin.f32 %v274, 0.0
    %v307 = vmin.f32 %v275, 0.0
    %v308 = vmin.f32 %v276, 0.0
    %v309 = vmin.f32 %v277, 0.0
    %v310 = vmin.f32 %v278, 0.0
    %v311 = vmin.f32 %v279, 0.0
    %v312 = vmin.f32 %v280, 0.0
    %v313 = vmin.f32 %v281, 0.0
    %v314 = vmin.f32 %v282, 0.0
    %v315 = vmin.f32 %v283, 0.0
    %v316 = vmin.f32 %v284, 0.0
    %v317 = vmin.f32 %v285, 0.0
    %v318 = vmin.f32 %v286, 0.0
    %v319 = vmin.f32 %v287, 0.0
    %v320 = vmin.f32 %v288, 0.0
    %v321 = vmin.f32 %v289, 0.0
    %v322 = vmin.f32 %v290, 0.0
    %v323 = vmin.f32 %v291, 0.0
    %v324 = vmin.f32 %v292, 0.0
    %v325 = vmin.f32 %v293, 0.0
    %v326 = vmin.f32 %v294, 0.0
    %v327 = vmin.f32 %v295, 0.0
    %v328 = vmin.f32 %v296, 0.0
    %v329 = vmin.f32 %v297, 0.0
    %v330 = vmin.f32 %v298, 0.0
    %v331 = vmin.f32 %v299, 0.0
    %v332 = vmin.f32 %v300, 0.0
    %v333 = vsel %vm22, %v301, 0.0
    %334 = vadd.xlane.f32.xlu0 %v333
    %v335 = vpop.xlane.xlu0 %334
    %v336 = vsel %vm22, %v302, 0.0
    %337 = vadd.xlane.f32.xlu0 %v336
    %v338 = vpop.xlane.xlu0 %337
    %v339 = vsel %vm22, %v303, 0.0
    %340 = vadd.xlane.f32.xlu0 %v339
    %v341 = vpop.xlane.xlu0 %340
    %v342 = vsel %vm22, %v304, 0.0
    %343 = vadd.xlane.f32.xlu0 %v342
    %v344 = vpop.xlane.xlu0 %343
    %v345 = vsel %vm22, %v305, 0.0
    %346 = vadd.xlane.f32.xlu0 %v345
    %v347 = vpop.xlane.xlu0 %346
    %v348 = vsel %vm22, %v306, 0.0
    %349 = vadd.xlane.f32.xlu0 %v348
    %v350 = vpop.xlane.xlu0 %349
    %v351 = vsel %vm22, %v307, 0.0
    %352 = vadd.xlane.f32.xlu0 %v351
    %v353 = vpop.xlane.xlu0 %352
    %v354 = vsel %vm22, %v308, 0.0
    %355 = vadd.xlane.f32.xlu0 %v354
    %v356 = vpop.xlane.xlu0 %355
    %v357 = vsel %vm22, %v309, 0.0
    %358 = vadd.xlane.f32.xlu0 %v357
    %v359 = vpop.xlane.xlu0 %358
    %v360 = vsel %vm22, %v310, 0.0
    %361 = vadd.xlane.f32.xlu0 %v360
    %v362 = vpop.xlane.xlu0 %361
    %v363 = vsel %vm22, %v311, 0.0
    %364 = vadd.xlane.f32.xlu0 %v363
    %v365 = vpop.xlane.xlu0 %364
    %v366 = vsel %vm22, %v312, 0.0
    %367 = vadd.xlane.f32.xlu0 %v366
    %v368 = vpop.xlane.xlu0 %367
    %v369 = vsel %vm22, %v313, 0.0
    %370 = vadd.xlane.f32.xlu0 %v369
    %v371 = vpop.xlane.xlu0 %370
    %v372 = vsel %vm22, %v314, 0.0
    %373 = vadd.xlane.f32.xlu0 %v372
    %v374 = vpop.xlane.xlu0 %373
    %v375 = vsel %vm22, %v315, 0.0
    %376 = vadd.xlane.f32.xlu0 %v375
    %v377 = vpop.xlane.xlu0 %376
    %v378 = vsel %vm22, %v316, 0.0
    %379 = vadd.xlane.f32.xlu0 %v378
    %v380 = vpop.xlane.xlu0 %379
    %v381 = vsel %vm22, %v317, 0.0
    %382 = vadd.xlane.f32.xlu0 %v381
    %v383 = vpop.xlane.xlu0 %382
    %v384 = vsel %vm22, %v318, 0.0
    %385 = vadd.xlane.f32.xlu0 %v384
    %v386 = vpop.xlane.xlu0 %385
    %v387 = vsel %vm22, %v319, 0.0
    %388 = vadd.xlane.f32.xlu0 %v387
    %v389 = vpop.xlane.xlu0 %388
    %v390 = vsel %vm22, %v320, 0.0
    %391 = vadd.xlane.f32.xlu0 %v390
    %v392 = vpop.xlane.xlu0 %391
    %v393 = vsel %vm22, %v321, 0.0
    %394 = vadd.xlane.f32.xlu0 %v393
    %v395 = vpop.xlane.xlu0 %394
    %v396 = vsel %vm22, %v322, 0.0
    %397 = vadd.xlane.f32.xlu0 %v396
    %v398 = vpop.xlane.xlu0 %397
    %v399 = vsel %vm22, %v323, 0.0
    %400 = vadd.xlane.f32.xlu0 %v399
    %v401 = vpop.xlane.xlu0 %400
    %v402 = vsel %vm22, %v324, 0.0
    %403 = vadd.xlane.f32.xlu0 %v402
    %v404 = vpop.xlane.xlu0 %403
    %v405 = vsel %vm22, %v325, 0.0
    %406 = vadd.xlane.f32.xlu0 %v405
    %v407 = vpop.xlane.xlu0 %406
    %v408 = vsel %vm22, %v326, 0.0
    %409 = vadd.xlane.f32.xlu0 %v408
    %v410 = vpop.xlane.xlu0 %409
    %v411 = vsel %vm22, %v327, 0.0
    %412 = vadd.xlane.f32.xlu0 %v411
    %v413 = vpop.xlane.xlu0 %412
    %v414 = vsel %vm22, %v328, 0.0
    %415 = vadd.xlane.f32.xlu0 %v414
    %v416 = vpop.xlane.xlu0 %415
    %v417 = vsel %vm22, %v329, 0.0
    %418 = vadd.xlane.f32.xlu0 %v417
    %v419 = vpop.xlane.xlu0 %418
    %v420 = vsel %vm22, %v330, 0.0
    %421 = vadd.xlane.f32.xlu0 %v420
    %v422 = vpop.xlane.xlu0 %421
    %v423 = vsel %vm22, %v331, 0.0
    %424 = vadd.xlane.f32.xlu0 %v423
    %v425 = vpop.xlane.xlu0 %424
    %v426 = vsel %vm22, %v332, 0.0
    %427 = vadd.xlane.f32.xlu0 %v426
    %v428 = vpop.xlane.xlu0 %427
    %v429 = vadd.f32 %v335, 1.0
    %v430 = vadd.f32 %v338, 1.0
    %v431 = vadd.f32 %v341, 1.0
    %v432 = vadd.f32 %v344, 1.0
    %v433 = vadd.f32 %v347, 1.0
    %v434 = vadd.f32 %v350, 1.0
    %v435 = vadd.f32 %v353, 1.0
    %v436 = vadd.f32 %v356, 1.0
    %v437 = vadd.f32 %v359, 1.0
    %v438 = vadd.f32 %v362, 1.0
    %v439 = vadd.f32 %v365, 1.0
    %v440 = vadd.f32 %v368, 1.0
    %v441 = vadd.f32 %v371, 1.0
    %v442 = vadd.f32 %v374, 1.0
    %v443 = vadd.f32 %v377, 1.0
    %v444 = vadd.f32 %v380, 1.0
    %v445 = vadd.f32 %v383, 1.0
    %v446 = vadd.f32 %v386, 1.0
    %v447 = vadd.f32 %v389, 1.0
    %v448 = vadd.f32 %v392, 1.0
    %v449 = vadd.f32 %v395, 1.0
    %v450 = vadd.f32 %v398, 1.0
    %v451 = vadd.f32 %v401, 1.0
    %v452 = vadd.f32 %v404, 1.0
    %v453 = vadd.f32 %v407, 1.0
    %v454 = vadd.f32 %v410, 1.0
    %v455 = vadd.f32 %v413, 1.0
    %v456 = vadd.f32 %v416, 1.0
    %v457 = vadd.f32 %v419, 1.0
    %v458 = vadd.f32 %v422, 1.0
    %v459 = vadd.f32 %v425, 1.0
    %v460 = vadd.f32 %v428, 1.0
    %vm461 = vcmp.gt.f32.partialorder %v429, 0.0
    %vm462 = vcmp.gt.f32.partialorder %v430, 0.0
    %vm463 = vcmp.gt.f32.partialorder %v431, 0.0
    %vm464 = vcmp.gt.f32.partialorder %v432, 0.0
    %vm465 = vcmp.gt.f32.partialorder %v433, 0.0
    %vm466 = vcmp.gt.f32.partialorder %v434, 0.0
    %vm467 = vcmp.gt.f32.partialorder %v435, 0.0
    %vm468 = vcmp.gt.f32.partialorder %v436, 0.0
    %vm469 = vcmp.gt.f32.partialorder %v437, 0.0
    %vm470 = vcmp.gt.f32.partialorder %v438, 0.0
    %vm471 = vcmp.gt.f32.partialorder %v439, 0.0
    %vm472 = vcmp.gt.f32.partialorder %v440, 0.0
    %vm473 = vcmp.gt.f32.partialorder %v441, 0.0
    %vm474 = vcmp.gt.f32.partialorder %v442, 0.0
    %vm475 = vcmp.gt.f32.partialorder %v443, 0.0
    %vm476 = vcmp.gt.f32.partialorder %v444, 0.0
    %vm477 = vcmp.gt.f32.partialorder %v445, 0.0
    %vm478 = vcmp.gt.f32.partialorder %v446, 0.0
    %vm479 = vcmp.gt.f32.partialorder %v447, 0.0
    %vm480 = vcmp.gt.f32.partialorder %v448, 0.0
    %vm481 = vcmp.gt.f32.partialorder %v449, 0.0
    %vm482 = vcmp.gt.f32.partialorder %v450, 0.0
    %vm483 = vcmp.gt.f32.partialorder %v451, 0.0
    %vm484 = vcmp.gt.f32.partialorder %v452, 0.0
    %vm485 = vcmp.gt.f32.partialorder %v453, 0.0
    %vm486 = vcmp.gt.f32.partialorder %v454, 0.0
    %vm487 = vcmp.gt.f32.partialorder %v455, 0.0
    %vm488 = vcmp.gt.f32.partialorder %v456, 0.0
    %vm489 = vcmp.gt.f32.partialorder %v457, 0.0
    %vm490 = vcmp.gt.f32.partialorder %v458, 0.0
    %vm491 = vcmp.gt.f32.partialorder %v459, 0.0
    %vm492 = vcmp.gt.f32.partialorder %v460, 0.0
    %v493 = vsel %vm461, 1, 0
    %v494 = vsel %vm462, 1, 0
    %v495 = vsel %vm463, 1, 0
    %v496 = vsel %vm464, 1, 0
    %v497 = vsel %vm465, 1, 0
    %v498 = vsel %vm466, 1, 0
    %v499 = vsel %vm467, 1, 0
    %v500 = vsel %vm468, 1, 0
    %v501 = vsel %vm469, 1, 0
    %v502 = vsel %vm470, 1, 0
    %v503 = vsel %vm471, 1, 0
    %v504 = vsel %vm472, 1, 0
    %v505 = vsel %vm473, 1, 0
    %v506 = vsel %vm474, 1, 0
    %v507 = vsel %vm475, 1, 0
    %v508 = vsel %vm476, 1, 0
    %v509 = vsel %vm477, 1, 0
    %v510 = vsel %vm478, 1, 0
    %v511 = vsel %vm479, 1, 0
    %v512 = vsel %vm480, 1, 0
    %v513 = vsel %vm481, 1, 0
    %v514 = vsel %vm482, 1, 0
    %v515 = vsel %vm483, 1, 0
    %v516 = vsel %vm484, 1, 0
    %v517 = vsel %vm485, 1, 0
    %v518 = vsel %vm486, 1, 0
    %v519 = vsel %vm487, 1, 0
    %v520 = vsel %vm488, 1, 0
    %v521 = vsel %vm489, 1, 0
    %v522 = vsel %vm490, 1, 0
    %v523 = vsel %vm491, 1, 0
    %v524 = vsel %vm492, 1, 0
    %v525 = vcvt.s32.f32 %v493
    %v526 = vcvt.s32.f32 %v494
    %v527 = vcvt.s32.f32 %v495
    %v528 = vcvt.s32.f32 %v496
    %v529 = vcvt.s32.f32 %v497
    %v530 = vcvt.s32.f32 %v498
    %v531 = vcvt.s32.f32 %v499
    %v532 = vcvt.s32.f32 %v500
    %v533 = vcvt.s32.f32 %v501
    %v534 = vcvt.s32.f32 %v502
    %v535 = vcvt.s32.f32 %v503
    %v536 = vcvt.s32.f32 %v504
    %v537 = vcvt.s32.f32 %v505
    %v538 = vcvt.s32.f32 %v506
    %v539 = vcvt.s32.f32 %v507
    %v540 = vcvt.s32.f32 %v508
    %v541 = vcvt.s32.f32 %v509
    %v542 = vcvt.s32.f32 %v510
    %v543 = vcvt.s32.f32 %v511
    %v544 = vcvt.s32.f32 %v512
    %v545 = vcvt.s32.f32 %v513
    %v546 = vcvt.s32.f32 %v514
    %v547 = vcvt.s32.f32 %v515
    %v548 = vcvt.s32.f32 %v516
    %v549 = vcvt.s32.f32 %v517
    %v550 = vcvt.s32.f32 %v518
    %v551 = vcvt.s32.f32 %v519
    %v552 = vcvt.s32.f32 %v520
    %v553 = vcvt.s32.f32 %v521
    %v554 = vcvt.s32.f32 %v522
    %v555 = vcvt.s32.f32 %v523
    %v556 = vcvt.s32.f32 %v524
    %v589 = vlaneseq
    %v590 = vand.u32 %v589, 127
    %v591 = vlaneseq
    %v592 = vshrl.u32 %v591, 7
    %v593 = vsub.s32 %v590, %v592
    %v594 = vrot.slane %v525, %v593
    %v595 = vadd.s32 %v590, 4294967288
    %v596 = vlaneseq
    %v597 = vshrl.u32 %v596, 7
    %v598 = vsub.s32 %v595, %v597
    %v599 = vrot.slane %v526, %v598
    %vm600 = vcmask 130112
    %v601 = vsel %vm600, %v599, %v594
    %v602 = vadd.s32 %v590, 4294967280
    %v603 = vlaneseq
    %v604 = vshrl.u32 %v603, 7
    %v605 = vsub.s32 %v602, %v604
    %v606 = vrot.slane %v527, %v605
    %vm607 = vcmask 195712
    %v608 = vsel %vm607, %v606, %v601
    %v609 = vadd.s32 %v590, 4294967272
    %v610 = vlaneseq
    %v611 = vshrl.u32 %v610, 7
    %v612 = vsub.s32 %v609, %v611
    %v613 = vrot.slane %v528, %v612
    %vm614 = vcmask 261312
    %v615 = vsel %vm614, %v613, %v608
    %v616 = vlaneseq
    %v617 = vshrl.u32 %v616, 7
    %v618 = vsub.s32 %v590, %v617
    %v619 = vrot.slane %v529, %v618
    %v620 = vlaneseq
    %v621 = vshrl.u32 %v620, 7
    %v622 = vsub.s32 %v595, %v621
    %v623 = vrot.slane %v530, %v622
    %v624 = vsel %vm600, %v623, %v619
    %v625 = vlaneseq
    %v626 = vshrl.u32 %v625, 7
    %v627 = vsub.s32 %v602, %v626
    %v628 = vrot.slane %v531, %v627
    %v629 = vsel %vm607, %v628, %v624
    %v630 = vlaneseq
    %v631 = vshrl.u32 %v630, 7
    %v632 = vsub.s32 %v609, %v631
    %v633 = vrot.slane %v532, %v632
    %v634 = vsel %vm614, %v633, %v629
    %v635 = vlaneseq
    %v636 = vshrl.u32 %v635, 7
    %v637 = vsub.s32 %v590, %v636
    %v638 = vrot.slane %v533, %v637
    %v639 = vlaneseq
    %v640 = vshrl.u32 %v639, 7
    %v641 = vsub.s32 %v595, %v640
    %v642 = vrot.slane %v534, %v641
    %v643 = vsel %vm600, %v642, %v638
    %v644 = vlaneseq
    %v645 = vshrl.u32 %v644, 7
    %v646 = vsub.s32 %v602, %v645
    %v647 = vrot.slane %v535, %v646
    %v648 = vsel %vm607, %v647, %v643
    %v649 = vlaneseq
    %v650 = vshrl.u32 %v649, 7
    %v651 = vsub.s32 %v609, %v650
    %v652 = vrot.slane %v536, %v651
    %v653 = vsel %vm614, %v652, %v648
    %v654 = vlaneseq
    %v655 = vshrl.u32 %v654, 7
    %v656 = vsub.s32 %v590, %v655
    %v657 = vrot.slane %v537, %v656
    %v658 = vlaneseq
    %v659 = vshrl.u32 %v658, 7
    %v660 = vsub.s32 %v595, %v659
    %v661 = vrot.slane %v538, %v660
    %v662 = vsel %vm600, %v661, %v657
    %v663 = vlaneseq
    %v664 = vshrl.u32 %v663, 7
    %v665 = vsub.s32 %v602, %v664
    %v666 = vrot.slane %v539, %v665
    %v667 = vsel %vm607, %v666, %v662
    %v668 = vlaneseq
    %v669 = vshrl.u32 %v668, 7
    %v670 = vsub.s32 %v609, %v669
    %v671 = vrot.slane %v540, %v670
    %v672 = vsel %vm614, %v671, %v667
    %v673 = vlaneseq
    %v674 = vshrl.u32 %v673, 7
    %v675 = vsub.s32 %v590, %v674
    %v676 = vrot.slane %v541, %v675
    %v677 = vlaneseq
    %v678 = vshrl.u32 %v677, 7
    %v679 = vsub.s32 %v595, %v678
    %v680 = vrot.slane %v542, %v679
    %v681 = vsel %vm600, %v680, %v676
    %v682 = vlaneseq
    %v683 = vshrl.u32 %v682, 7
    %v684 = vsub.s32 %v602, %v683
    %v685 = vrot.slane %v543, %v684
    %v686 = vsel %vm607, %v685, %v681
    %v687 = vlaneseq
    %v688 = vshrl.u32 %v687, 7
    %v689 = vsub.s32 %v609, %v688
    %v690 = vrot.slane %v544, %v689
    %v691 = vsel %vm614, %v690, %v686
    %v692 = vlaneseq
    %v693 = vshrl.u32 %v692, 7
    %v694 = vsub.s32 %v590, %v693
    %v695 = vrot.slane %v545, %v694
    %v696 = vlaneseq
    %v697 = vshrl.u32 %v696, 7
    %v698 = vsub.s32 %v595, %v697
    %v699 = vrot.slane %v546, %v698
    %v700 = vsel %vm600, %v699, %v695
    %v701 = vlaneseq
    %v702 = vshrl.u32 %v701, 7
    %v703 = vsub.s32 %v602, %v702
    %v704 = vrot.slane %v547, %v703
    %v705 = vsel %vm607, %v704, %v700
    %v706 = vlaneseq
    %v707 = vshrl.u32 %v706, 7
    %v708 = vsub.s32 %v609, %v707
    %v709 = vrot.slane %v548, %v708
    %v710 = vsel %vm614, %v709, %v705
    %v711 = vlaneseq
    %v712 = vshrl.u32 %v711, 7
    %v713 = vsub.s32 %v590, %v712
    %v714 = vrot.slane %v549, %v713
    %v715 = vlaneseq
    %v716 = vshrl.u32 %v715, 7
    %v717 = vsub.s32 %v595, %v716
    %v718 = vrot.slane %v550, %v717
    %v719 = vsel %vm600, %v718, %v714
    %v720 = vlaneseq
    %v721 = vshrl.u32 %v720, 7
    %v722 = vsub.s32 %v602, %v721
    %v723 = vrot.slane %v551, %v722
    %v724 = vsel %vm607, %v723, %v719
    %v725 = vlaneseq
    %v726 = vshrl.u32 %v725, 7
    %v727 = vsub.s32 %v609, %v726
    %v728 = vrot.slane %v552, %v727
    %v729 = vsel %vm614, %v728, %v724
    %v730 = vlaneseq
    %v731 = vshrl.u32 %v730, 7
    %v732 = vsub.s32 %v590, %v731
    %v733 = vrot.slane %v553, %v732
    %v734 = vlaneseq
    %v735 = vshrl.u32 %v734, 7
    %v736 = vsub.s32 %v595, %v735
    %v737 = vrot.slane %v554, %v736
    %v738 = vsel %vm600, %v737, %v733
    %v739 = vlaneseq
    %v740 = vshrl.u32 %v739, 7
    %v741 = vsub.s32 %v602, %v740
    %v742 = vrot.slane %v555, %v741
    %v743 = vsel %vm607, %v742, %v738
    %v744 = vlaneseq
    %v745 = vshrl.u32 %v744, 7
    %v746 = vsub.s32 %v609, %v745
    %v747 = vrot.slane %v556, %v746
    %v748 = vsel %vm614, %v747, %v743
    %vm749 = vcmask 1041409
    %v750 = vsel %vm749, %v634, %v615
    %vm751 = vcmask 1042434
    %v752 = vsel %vm751, %v653, %v750
    %vm753 = vcmask 1043459
    %v754 = vsel %vm753, %v672, %v752
    %vm755 = vcmask 1044484
    %v756 = vsel %vm755, %v691, %v754
    %vm757 = vcmask 1045509
    %v758 = vsel %vm757, %v710, %v756
    %vm759 = vcmask 1046534
    %v760 = vsel %vm759, %v729, %v758
    %vm761 = vcmask 1047559
    %v762 = vsel %vm761, %v748, %v760
    %v764 = vsel %vm22, %v762, 0.0
    %765 = vadd.xlane.f32.xlu0 %v764
    %v766 = vpop.xlane.xlu0 %765
    %v767 = vlaneseq
    %v768 = vshrl.u32 %v767, 7
    %v769 = vsub.s32 0, %v768
    %v770 = vrot.slane %v26, %v769
    %772 = vbcast.lane.b32.xlu0 %v770, 256
    %v773 = vpop.permute.xlu0 %772
    %s775 = sor.u32 256, 8
    %776 = vbcast.lane.b32.xlu0 %v770, %s775
    %v777 = vpop.permute.xlu0 %776
    %s779 = sor.u32 256, 16
    %780 = vbcast.lane.b32.xlu0 %v770, %s779
    %v781 = vpop.permute.xlu0 %780
    %s783 = sor.u32 256, 24
    %784 = vbcast.lane.b32.xlu0 %v770, %s783
    %v785 = vpop.permute.xlu0 %784
    %v786 = vlaneseq
    %v787 = vshrl.u32 %v786, 7
    %v788 = vsub.s32 1, %v787
    %v789 = vrot.slane %v26, %v788
    %791 = vbcast.lane.b32.xlu0 %v789, 256
    %v792 = vpop.permute.xlu0 %791
    %s794 = sor.u32 256, 8
    %795 = vbcast.lane.b32.xlu0 %v789, %s794
    %v796 = vpop.permute.xlu0 %795
    %s798 = sor.u32 256, 16
    %799 = vbcast.lane.b32.xlu0 %v789, %s798
    %v800 = vpop.permute.xlu0 %799
    %s802 = sor.u32 256, 24
    %803 = vbcast.lane.b32.xlu0 %v789, %s802
    %v804 = vpop.permute.xlu0 %803
    %v805 = vlaneseq
    %v806 = vshrl.u32 %v805, 7
    %v807 = vsub.s32 2, %v806
    %v808 = vrot.slane %v26, %v807
    %810 = vbcast.lane.b32.xlu0 %v808, 256
    %v811 = vpop.permute.xlu0 %810
    %s813 = sor.u32 256, 8
    %814 = vbcast.lane.b32.xlu0 %v808, %s813
    %v815 = vpop.permute.xlu0 %814
    %s817 = sor.u32 256, 16
    %818 = vbcast.lane.b32.xlu0 %v808, %s817
    %v819 = vpop.permute.xlu0 %818
    %s821 = sor.u32 256, 24
    %822 = vbcast.lane.b32.xlu0 %v808, %s821
    %v823 = vpop.permute.xlu0 %822
    %v824 = vlaneseq
    %v825 = vshrl.u32 %v824, 7
    %v826 = vsub.s32 3, %v825
    %v827 = vrot.slane %v26, %v826
    %829 = vbcast.lane.b32.xlu0 %v827, 256
    %v830 = vpop.permute.xlu0 %829
    %s832 = sor.u32 256, 8
    %833 = vbcast.lane.b32.xlu0 %v827, %s832
    %v834 = vpop.permute.xlu0 %833
    %s836 = sor.u32 256, 16
    %837 = vbcast.lane.b32.xlu0 %v827, %s836
    %v838 = vpop.permute.xlu0 %837
    %s840 = sor.u32 256, 24
    %841 = vbcast.lane.b32.xlu0 %v827, %s840
    %v842 = vpop.permute.xlu0 %841
    %v843 = vlaneseq
    %v844 = vshrl.u32 %v843, 7
    %v845 = vsub.s32 4, %v844
    %v846 = vrot.slane %v26, %v845
    %848 = vbcast.lane.b32.xlu0 %v846, 256
    %v849 = vpop.permute.xlu0 %848
    %s851 = sor.u32 256, 8
    %852 = vbcast.lane.b32.xlu0 %v846, %s851
    %v853 = vpop.permute.xlu0 %852
    %s855 = sor.u32 256, 16
    %856 = vbcast.lane.b32.xlu0 %v846, %s855
    %v857 = vpop.permute.xlu0 %856
    %s859 = sor.u32 256, 24
    %860 = vbcast.lane.b32.xlu0 %v846, %s859
    %v861 = vpop.permute.xlu0 %860
    %v862 = vlaneseq
    %v863 = vshrl.u32 %v862, 7
    %v864 = vsub.s32 5, %v863
    %v865 = vrot.slane %v26, %v864
    %867 = vbcast.lane.b32.xlu0 %v865, 256
    %v868 = vpop.permute.xlu0 %867
    %s870 = sor.u32 256, 8
    %871 = vbcast.lane.b32.xlu0 %v865, %s870
    %v872 = vpop.permute.xlu0 %871
    %s874 = sor.u32 256, 16
    %875 = vbcast.lane.b32.xlu0 %v865, %s874
    %v876 = vpop.permute.xlu0 %875
    %s878 = sor.u32 256, 24
    %879 = vbcast.lane.b32.xlu0 %v865, %s878
    %v880 = vpop.permute.xlu0 %879
    %v881 = vlaneseq
    %v882 = vshrl.u32 %v881, 7
    %v883 = vsub.s32 6, %v882
    %v884 = vrot.slane %v26, %v883
    %886 = vbcast.lane.b32.xlu0 %v884, 256
    %v887 = vpop.permute.xlu0 %886
    %s889 = sor.u32 256, 8
    %890 = vbcast.lane.b32.xlu0 %v884, %s889
    %v891 = vpop.permute.xlu0 %890
    %s893 = sor.u32 256, 16
    %894 = vbcast.lane.b32.xlu0 %v884, %s893
    %v895 = vpop.permute.xlu0 %894
    %s897 = sor.u32 256, 24
    %898 = vbcast.lane.b32.xlu0 %v884, %s897
    %v899 = vpop.permute.xlu0 %898
    %v900 = vlaneseq
    %v901 = vshrl.u32 %v900, 7
    %v902 = vsub.s32 7, %v901
    %v903 = vrot.slane %v26, %v902
    %905 = vbcast.lane.b32.xlu0 %v903, 256
    %v906 = vpop.permute.xlu0 %905
    %s908 = sor.u32 256, 8
    %909 = vbcast.lane.b32.xlu0 %v903, %s908
    %v910 = vpop.permute.xlu0 %909
    %s912 = sor.u32 256, 16
    %913 = vbcast.lane.b32.xlu0 %v903, %s912
    %v914 = vpop.permute.xlu0 %913
    %s916 = sor.u32 256, 24
    %917 = vbcast.lane.b32.xlu0 %v903, %s916
    %v918 = vpop.permute.xlu0 %917
    %v951 = vsel %vm461, %v773, 0.0
    %v952 = vsel %vm462, %v777, 0.0
    %v953 = vsel %vm463, %v781, 0.0
    %v954 = vsel %vm464, %v785, 0.0
    %v955 = vsel %vm465, %v792, 0.0
    %v956 = vsel %vm466, %v796, 0.0
    %v957 = vsel %vm467, %v800, 0.0
    %v958 = vsel %vm468, %v804, 0.0
    %v959 = vsel %vm469, %v811, 0.0
    %v960 = vsel %vm470, %v815, 0.0
    %v961 = vsel %vm471, %v819, 0.0
    %v962 = vsel %vm472, %v823, 0.0
    %v963 = vsel %vm473, %v830, 0.0
    %v964 = vsel %vm474, %v834, 0.0
    %v965 = vsel %vm475, %v838, 0.0
    %v966 = vsel %vm476, %v842, 0.0
    %v967 = vsel %vm477, %v849, 0.0
    %v968 = vsel %vm478, %v853, 0.0
    %v969 = vsel %vm479, %v857, 0.0
    %v970 = vsel %vm480, %v861, 0.0
    %v971 = vsel %vm481, %v868, 0.0
    %v972 = vsel %vm482, %v872, 0.0
    %v973 = vsel %vm483, %v876, 0.0
    %v974 = vsel %vm484, %v880, 0.0
    %v975 = vsel %vm485, %v887, 0.0
    %v976 = vsel %vm486, %v891, 0.0
    %v977 = vsel %vm487, %v895, 0.0
    %v978 = vsel %vm488, %v899, 0.0
    %v979 = vsel %vm489, %v906, 0.0
    %v980 = vsel %vm490, %v910, 0.0
    %v981 = vsel %vm491, %v914, 0.0
    %v982 = vsel %vm492, %v918, 0.0
    %1015 = vset.pattern.permute.xlu0 0
    %1016 = vperm.xlu0 %1015, %v951
    %v1017 = vpop.permute.xlu0 %1016
    %1018 = vset.pattern.permute.xlu0 0
    %1019 = vperm.xlu0 %1018, %v952
    %v1020 = vpop.permute.xlu0 %1019
    %1021 = vset.pattern.permute.xlu0 0
    %1022 = vperm.xlu0 %1021, %v953
    %v1023 = vpop.permute.xlu0 %1022
    %1024 = vset.pattern.permute.xlu0 0
    %1025 = vperm.xlu0 %1024, %v954
    %v1026 = vpop.permute.xlu0 %1025
    %1027 = vset.pattern.permute.xlu0 0
    %1028 = vperm.xlu0 %1027, %v955
    %v1029 = vpop.permute.xlu0 %1028
    %1030 = vset.pattern.permute.xlu0 0
    %1031 = vperm.xlu0 %1030, %v956
    %v1032 = vpop.permute.xlu0 %1031
    %1033 = vset.pattern.permute.xlu0 0
    %1034 = vperm.xlu0 %1033, %v957
    %v1035 = vpop.permute.xlu0 %1034
    %1036 = vset.pattern.permute.xlu0 0
    %1037 = vperm.xlu0 %1036, %v958
    %v1038 = vpop.permute.xlu0 %1037
    %1039 = vset.pattern.permute.xlu0 0
    %1040 = vperm.xlu0 %1039, %v959
    %v1041 = vpop.permute.xlu0 %1040
    %1042 = vset.pattern.permute.xlu0 0
    %1043 = vperm.xlu0 %1042, %v960
    %v1044 = vpop.permute.xlu0 %1043
    %1045 = vset.pattern.permute.xlu0 0
    %1046 = vperm.xlu0 %1045, %v961
    %v1047 = vpop.permute.xlu0 %1046
    %1048 = vset.pattern.permute.xlu0 0
    %1049 = vperm.xlu0 %1048, %v962
    %v1050 = vpop.permute.xlu0 %1049
    %1051 = vset.pattern.permute.xlu0 0
    %1052 = vperm.xlu0 %1051, %v963
    %v1053 = vpop.permute.xlu0 %1052
    %1054 = vset.pattern.permute.xlu0 0
    %1055 = vperm.xlu0 %1054, %v964
    %v1056 = vpop.permute.xlu0 %1055
    %1057 = vset.pattern.permute.xlu0 0
    %1058 = vperm.xlu0 %1057, %v965
    %v1059 = vpop.permute.xlu0 %1058
    %1060 = vset.pattern.permute.xlu0 0
    %1061 = vperm.xlu0 %1060, %v966
    %v1062 = vpop.permute.xlu0 %1061
    %1063 = vset.pattern.permute.xlu0 0
    %1064 = vperm.xlu0 %1063, %v967
    %v1065 = vpop.permute.xlu0 %1064
    %1066 = vset.pattern.permute.xlu0 0
    %1067 = vperm.xlu0 %1066, %v968
    %v1068 = vpop.permute.xlu0 %1067
    %1069 = vset.pattern.permute.xlu0 0
    %1070 = vperm.xlu0 %1069, %v969
    %v1071 = vpop.permute.xlu0 %1070
    %1072 = vset.pattern.permute.xlu0 0
    %1073 = vperm.xlu0 %1072, %v970
    %v1074 = vpop.permute.xlu0 %1073
    %1075 = vset.pattern.permute.xlu0 0
    %1076 = vperm.xlu0 %1075, %v971
    %v1077 = vpop.permute.xlu0 %1076
    %1078 = vset.pattern.permute.xlu0 0
    %1079 = vperm.xlu0 %1078, %v972
    %v1080 = vpop.permute.xlu0 %1079
    %1081 = vset.pattern.permute.xlu0 0
    %1082 = vperm.xlu0 %1081, %v973
    %v1083 = vpop.permute.xlu0 %1082
    %1084 = vset.pattern.permute.xlu0 0
    %1085 = vperm.xlu0 %1084, %v974
    %v1086 = vpop.permute.xlu0 %1085
    %1087 = vset.pattern.permute.xlu0 0
    %1088 = vperm.xlu0 %1087, %v975
    %v1089 = vpop.permute.xlu0 %1088
    %1090 = vset.pattern.permute.xlu0 0
    %1091 = vperm.xlu0 %1090, %v976
    %v1092 = vpop.permute.xlu0 %1091
    %1093 = vset.pattern.permute.xlu0 0
    %1094 = vperm.xlu0 %1093, %v977
    %v1095 = vpop.permute.xlu0 %1094
    %1096 = vset.pattern.permute.xlu0 0
    %1097 = vperm.xlu0 %1096, %v978
    %v1098 = vpop.permute.xlu0 %1097
    %1099 = vset.pattern.permute.xlu0 0
    %1100 = vperm.xlu0 %1099, %v979
    %v1101 = vpop.permute.xlu0 %1100
    %1102 = vset.pattern.permute.xlu0 0
    %1103 = vperm.xlu0 %1102, %v980
    %v1104 = vpop.permute.xlu0 %1103
    %1105 = vset.pattern.permute.xlu0 0
    %1106 = vperm.xlu0 %1105, %v981
    %v1107 = vpop.permute.xlu0 %1106
    %1108 = vset.pattern.permute.xlu0 0
    %1109 = vperm.xlu0 %1108, %v982
    %v1110 = vpop.permute.xlu0 %1109
    %v1111 = vlaneseq
    %v1112 = vshrl.u32 %v1111, 7
    %v1113 = vsub.s32 %v590, %v1112
    %v1114 = vrot.slane %v1017, %v1113
    %v1115 = vlaneseq
    %v1116 = vshrl.u32 %v1115, 7
    %v1117 = vsub.s32 %v595, %v1116
    %v1118 = vrot.slane %v1020, %v1117
    %v1119 = vsel %vm600, %v1118, %v1114
    %v1120 = vlaneseq
    %v1121 = vshrl.u32 %v1120, 7
    %v1122 = vsub.s32 %v602, %v1121
    %v1123 = vrot.slane %v1023, %v1122
    %v1124 = vsel %vm607, %v1123, %v1119
    %v1125 = vlaneseq
    %v1126 = vshrl.u32 %v1125, 7
    %v1127 = vsub.s32 %v609, %v1126
    %v1128 = vrot.slane %v1026, %v1127
    %v1129 = vsel %vm614, %v1128, %v1124
    %v1130 = vlaneseq
    %v1131 = vshrl.u32 %v1130, 7
    %v1132 = vsub.s32 %v590, %v1131
    %v1133 = vrot.slane %v1029, %v1132
    %v1134 = vlaneseq
    %v1135 = vshrl.u32 %v1134, 7
    %v1136 = vsub.s32 %v595, %v1135
    %v1137 = vrot.slane %v1032, %v1136
    %v1138 = vsel %vm600, %v1137, %v1133
    %v1139 = vlaneseq
    %v1140 = vshrl.u32 %v1139, 7
    %v1141 = vsub.s32 %v602, %v1140
    %v1142 = vrot.slane %v1035, %v1141
    %v1143 = vsel %vm607, %v1142, %v1138
    %v1144 = vlaneseq
    %v1145 = vshrl.u32 %v1144, 7
    %v1146 = vsub.s32 %v609, %v1145
    %v1147 = vrot.slane %v1038, %v1146
    %v1148 = vsel %vm614, %v1147, %v1143
    %v1149 = vlaneseq
    %v1150 = vshrl.u32 %v1149, 7
    %v1151 = vsub.s32 %v590, %v1150
    %v1152 = vrot.slane %v1041, %v1151
    %v1153 = vlaneseq
    %v1154 = vshrl.u32 %v1153, 7
    %v1155 = vsub.s32 %v595, %v1154
    %v1156 = vrot.slane %v1044, %v1155
    %v1157 = vsel %vm600, %v1156, %v1152
    %v1158 = vlaneseq
    %v1159 = vshrl.u32 %v1158, 7
    %v1160 = vsub.s32 %v602, %v1159
    %v1161 = vrot.slane %v1047, %v1160
    %v1162 = vsel %vm607, %v1161, %v1157
    %v1163 = vlaneseq
    %v1164 = vshrl.u32 %v1163, 7
    %v1165 = vsub.s32 %v609, %v1164
    %v1166 = vrot.slane %v1050, %v1165
    %v1167 = vsel %vm614, %v1166, %v1162
    %v1168 = vlaneseq
    %v1169 = vshrl.u32 %v1168, 7
    %v1170 = vsub.s32 %v590, %v1169
    %v1171 = vrot.slane %v1053, %v1170
    %v1172 = vlaneseq
    %v1173 = vshrl.u32 %v1172, 7
    %v1174 = vsub.s32 %v595, %v1173
    %v1175 = vrot.slane %v1056, %v1174
    %v1176 = vsel %vm600, %v1175, %v1171
    %v1177 = vlaneseq
    %v1178 = vshrl.u32 %v1177, 7
    %v1179 = vsub.s32 %v602, %v1178
    %v1180 = vrot.slane %v1059, %v1179
    %v1181 = vsel %vm607, %v1180, %v1176
    %v1182 = vlaneseq
    %v1183 = vshrl.u32 %v1182, 7
    %v1184 = vsub.s32 %v609, %v1183
    %v1185 = vrot.slane %v1062, %v1184
    %v1186 = vsel %vm614, %v1185, %v1181
    %v1187 = vlaneseq
    %v1188 = vshrl.u32 %v1187, 7
    %v1189 = vsub.s32 %v590, %v1188
    %v1190 = vrot.slane %v1065, %v1189
    %v1191 = vlaneseq
    %v1192 = vshrl.u32 %v1191, 7
    %v1193 = vsub.s32 %v595, %v1192
    %v1194 = vrot.slane %v1068, %v1193
    %v1195 = vsel %vm600, %v1194, %v1190
    %v1196 = vlaneseq
    %v1197 = vshrl.u32 %v1196, 7
    %v1198 = vsub.s32 %v602, %v1197
    %v1199 = vrot.slane %v1071, %v1198
    %v1200 = vsel %vm607, %v1199, %v1195
    %v1201 = vlaneseq
    %v1202 = vshrl.u32 %v1201, 7
    %v1203 = vsub.s32 %v609, %v1202
    %v1204 = vrot.slane %v1074, %v1203
    %v1205 = vsel %vm614, %v1204, %v1200
    %v1206 = vlaneseq
    %v1207 = vshrl.u32 %v1206, 7
    %v1208 = vsub.s32 %v590, %v1207
    %v1209 = vrot.slane %v1077, %v1208
    %v1210 = vlaneseq
    %v1211 = vshrl.u32 %v1210, 7
    %v1212 = vsub.s32 %v595, %v1211
    %v1213 = vrot.slane %v1080, %v1212
    %v1214 = vsel %vm600, %v1213, %v1209
    %v1215 = vlaneseq
    %v1216 = vshrl.u32 %v1215, 7
    %v1217 = vsub.s32 %v602, %v1216
    %v1218 = vrot.slane %v1083, %v1217
    %v1219 = vsel %vm607, %v1218, %v1214
    %v1220 = vlaneseq
    %v1221 = vshrl.u32 %v1220, 7
    %v1222 = vsub.s32 %v609, %v1221
    %v1223 = vrot.slane %v1086, %v1222
    %v1224 = vsel %vm614, %v1223, %v1219
    %v1225 = vlaneseq
    %v1226 = vshrl.u32 %v1225, 7
    %v1227 = vsub.s32 %v590, %v1226
    %v1228 = vrot.slane %v1089, %v1227
    %v1229 = vlaneseq
    %v1230 = vshrl.u32 %v1229, 7
    %v1231 = vsub.s32 %v595, %v1230
    %v1232 = vrot.slane %v1092, %v1231
    %v1233 = vsel %vm600, %v1232, %v1228
    %v1234 = vlaneseq
    %v1235 = vshrl.u32 %v1234, 7
    %v1236 = vsub.s32 %v602, %v1235
    %v1237 = vrot.slane %v1095, %v1236
    %v1238 = vsel %vm607, %v1237, %v1233
    %v1239 = vlaneseq
    %v1240 = vshrl.u32 %v1239, 7
    %v1241 = vsub.s32 %v609, %v1240
    %v1242 = vrot.slane %v1098, %v1241
    %v1243 = vsel %vm614, %v1242, %v1238
    %v1244 = vlaneseq
    %v1245 = vshrl.u32 %v1244, 7
    %v1246 = vsub.s32 %v590, %v1245
    %v1247 = vrot.slane %v1101, %v1246
    %v1248 = vlaneseq
    %v1249 = vshrl.u32 %v1248, 7
    %v1250 = vsub.s32 %v595, %v1249
    %v1251 = vrot.slane %v1104, %v1250
    %v1252 = vsel %vm600, %v1251, %v1247
    %v1253 = vlaneseq
    %v1254 = vshrl.u32 %v1253, 7
    %v1255 = vsub.s32 %v602, %v1254
    %v1256 = vrot.slane %v1107, %v1255
    %v1257 = vsel %vm607, %v1256, %v1252
    %v1258 = vlaneseq
    %v1259 = vshrl.u32 %v1258, 7
    %v1260 = vsub.s32 %v609, %v1259
    %v1261 = vrot.slane %v1110, %v1260
    %v1262 = vsel %vm614, %v1261, %v1257
    %v1263 = vsel %vm749, %v1148, %v1129
    %v1264 = vsel %vm751, %v1167, %v1263
    %v1265 = vsel %vm753, %v1186, %v1264
    %v1266 = vsel %vm755, %v1205, %v1265
    %v1267 = vsel %vm757, %v1224, %v1266
    %v1268 = vsel %vm759, %v1243, %v1267
    %v1269 = vsel %vm761, %v1262, %v1268
    %v1271 = vsel %vm22, %v1269, 0.0
    %1272 = vadd.xlane.f32.xlu0 %v1271
    %v1273 = vpop.xlane.xlu0 %1272
    %v1274 = vsub.f32 %v1273, 1.0
    %v1275 = vrcp.pop %v766
    %v1276 = vmul.f32 %v1274, %v1275
    %v1277 = vsub.f32 %v26, %v1276
    %v1278 = vmax.f32 %v1277, 0.0
    %1279 = vst.msk [vmem:[#allocation5] sm:$0xff] %vm22, %v1278
    // Predicated region
    $region10: #{tpu_custom_call.1} parent=1 // pred_check
      _
    $region11: #{tpu_custom_call.1} parent=1 // pred_check_branch
      %1281 = sbr.rel (0) target = $region13
    $region12: #{tpu_custom_call.1} parent=1 // pred_region
      %s1283 = ssub.s32 128, 128
      %1284 = vsyncadd [#allocation4], %s1283
      %s1286 = sshll.u32 [#allocation5], 4
      %s1287 = int_to_ptr.vmem [resolvable:$true] %s1286
      %1289 = dma.vmem_to_hbm [thread:$0]  %s1287, 128, %s1, [#allocation4]
    $region13: #{tpu_custom_call.1} parent=1 // pred_fallthru
      _
    // Predicated region
    $region14: #{tpu_custom_call.1} parent=1 // pred_check
      _
    $region15: #{tpu_custom_call.1} parent=1 // pred_check_branch
      %1291 = sbr.rel (0) target = $region17
    $region16: #{tpu_custom_call.1} parent=1 // pred_region
      %1292 = dma.done [#allocation4], 128
    $region17: #{tpu_custom_call.1} parent=1 // pred_fallthru
      _
    %1293 = vsyncpa [#allocation3], 1
    %1294 = vsyncpa [#allocation4], 1

</llo_original>
